<compile_context>
chip_gen: v6e
topology: v6e:2x2x1
jax: 0.10.0
libtpu: 0.0.40
codegen_flags: <defaults>
</compile_context>

<pallas_src>
import functools

import jax
import jax.numpy as jnp
import numpy as np
from jax.experimental import pallas as pl
from jax.experimental.pallas import tpu as pltpu


def _lstm_kernel(seq_ref, emb_ref, wih_ref, whh_ref, b_ref, out_ref,
                 *, seq_len, batch, hidden):
    """Embedding gather + input projection + LSTM recurrence, one invocation.

    seq_ref : SMEM (B, T) int32   token ids (scalar-prefetch)
    emb_ref : VMEM (dict, 1, E)   embedding table (leading-dim gather layout)
    wih_ref : VMEM (E, 4H)        W_ih^T
    whh_ref : VMEM (H, 4H)        W_hh^T
    b_ref   : VMEM (1, 4H)        b_ih + b_hh
    out_ref : VMEM (B, H)         h_T
    """
    T, B, H = seq_len, batch, hidden

    # ---- Phase 0: fused embedding gather, time-major row order ----
    # x2d[t*B + b] = emb[seq[b, t]]; dynamic leading-dim ref indexing, unrolled.
    rows = []
    for t in range(T):
        for b in range(B):
            rows.append(emb_ref[seq_ref[b, t]])          # (1, E)
    x2d = jnp.concatenate(rows, axis=0)                  # (T*B, E)

    # ---- Phase 1: all-timestep input projection, one wide MXU matmul ----
    # (T*B, E) @ (E, 4H) + (1, 4H); bias folded in once.  Latency-bound at this
    # size — no tiling / utilization games.
    gx = (
        jnp.dot(x2d, wih_ref[...], preferred_element_type=jnp.float32)
        + b_ref[...]
    )                                                     # (T*B, 4H), stays in vregs

    whh = whh_ref[...]                                    # (H, 4H) resident across steps

    # ---- Phase 2: serial recurrence, fully unrolled (T=8), static gx slices ----
    # TODO(synk): if a bundle dump shows the RHS being re-pushed each step, hold
    # W_hh in MXU weight regs with pltpu.matmul_push_rhs / matmul_acc_lhs.
    h = jnp.zeros((B, H), jnp.float32)
    c = jnp.zeros((B, H), jnp.float32)
    for t in range(T):
        gates = gx[t * B:(t + 1) * B, :] + jnp.dot(
            h, whh, preferred_element_type=jnp.float32)   # (B, 4H)
        # Full-width activations: one sigmoid + one tanh EUP push over the whole
        # (B, 4H) value, then cheap lane slices for the VALU combine.
        sg = jax.nn.sigmoid(gates)
        th = jnp.tanh(gates)
        i_g = sg[:, 0 * H:1 * H]
        f_g = sg[:, 1 * H:2 * H]
        g_g = th[:, 2 * H:3 * H]
        o_g = sg[:, 3 * H:4 * H]
        c = f_g * c + i_g * g_g
        h = o_g * jnp.tanh(c)

    out_ref[...] = h.astype(out_ref.dtype)


def prepare_lstm_params(embed_table, w_ih, w_hh, b_ih, b_hh):
    """One-time parameter prep (NOT on the per-forward path).

    Pre-transposes the weights, fuses the two biases, and reshapes the embedding
    table to (dict, 1, E) so the kernel can gather rows by leading-dim indexing.
    """
    dict_size, embed_size = embed_table.shape
    four_h = w_ih.shape[0]
    return {
        "emb3": embed_table.reshape(dict_size, 1, embed_size),   # (D, 1, E)
        "wih_t": jnp.transpose(w_ih),                            # (E, 4H)
        "whh_t": jnp.transpose(w_hh),                            # (H, 4H)
        "bias": (b_ih + b_hh).reshape(1, four_h),                # (1, 4H)
    }


def lstm_encoder_forward(seq_ids, params):
    """seq_ids: (B, T) int32.  Returns (B, H) = last-timestep LSTM hidden state."""
    B, T = seq_ids.shape
    emb3 = params["emb3"]
    wih_t = params["wih_t"]
    whh_t = params["whh_t"]
    bias = params["bias"]
    D, _, E = emb3.shape
    H = whh_t.shape[0]
    H4 = 4 * H

    kernel = functools.partial(_lstm_kernel, seq_len=T, batch=B, hidden=H)

    out = pl.pallas_call(
        kernel,
        out_shape=jax.ShapeDtypeStruct((B, H), jnp.float32),
        grid_spec=pltpu.PrefetchScalarGridSpec(
            num_scalar_prefetch=1,            # seq_ids -> SMEM
            grid=(1,),                        # recurrence lives inside the kernel
            in_specs=[
                pl.BlockSpec((D, 1, E), lambda i, seq: (0, 0, 0)),   # embed table
                pl.BlockSpec((E, H4), lambda i, seq: (0, 0)),        # W_ih^T
                pl.BlockSpec((H, H4), lambda i, seq: (0, 0)),        # W_hh^T
                pl.BlockSpec((1, H4), lambda i, seq: (0, 0)),        # fused bias
            ],
            out_specs=pl.BlockSpec((B, H), lambda i, seq: (0, 0)),
        ),
        compiler_params=pltpu.CompilerParams(
            dimension_semantics=("arbitrary",),
        ),
    )(seq_ids, emb3, wih_t, whh_t, bias)
    return out


def _reference_forward(seq_ids, embed_table, w_ih, w_hh, b_ih, b_hh):
    """Pure-JAX reference (lax.scan LSTM) for a correctness check."""
    x = jnp.take(embed_table, seq_ids, axis=0)           # (B, T, E)
    B = x.shape[0]
    H = w_hh.shape[1]
    h0 = jnp.zeros((B, H), jnp.float32)
    c0 = jnp.zeros((B, H), jnp.float32)

    def step(carry, x_t):
        h, c = carry
        gates = x_t @ w_ih.T + b_ih + h @ w_hh.T + b_hh
        i_g, f_g, g_g, o_g = jnp.split(gates, 4, axis=-1)
        i_g, f_g, o_g = map(jax.nn.sigmoid, (i_g, f_g, o_g))
        g_g = jnp.tanh(g_g)
        c_new = f_g * c + i_g * g_g
        h_new = o_g * jnp.tanh(c_new)
        return (h_new, c_new), h_new

    (h_T, _), _ = jax.lax.scan(step, (h0, c0), jnp.transpose(x, (1, 0, 2)))
    return h_T


if __name__ == "__main__":
    # Module hyperparameters (small, consistent with forward()).
    hidden_size = 32
    batch_size = 2
    embed_size = 16
    dict_size = 50
    maxlength = 8          # sequence length T
    # usingw2v = False -> embedding lookup applied.
    # TODO(synk): nn.LSTM dropout=0.2 is inert for a single-layer LSTM (PyTorch
    # ignores it), so no dropout is implemented.

    key = jax.random.PRNGKey(0)
    k_seq, k_emb, k_wih, k_whh, k_bih, k_bhh = jax.random.split(key, 6)

    seq_ids = jax.random.randint(k_seq, (batch_size, maxlength), 0, dict_size,
                                 dtype=jnp.int32)

    scale = 1.0 / np.sqrt(hidden_size)
    embed_table = jax.random.normal(k_emb, (dict_size, embed_size), jnp.float32)
    w_ih = jax.random.uniform(k_wih, (4 * hidden_size, embed_size), jnp.float32,
                              -scale, scale)
    w_hh = jax.random.uniform(k_whh, (4 * hidden_size, hidden_size), jnp.float32,
                              -scale, scale)
    b_ih = jax.random.uniform(k_bih, (4 * hidden_size,), jnp.float32, -scale, scale)
    b_hh = jax.random.uniform(k_bhh, (4 * hidden_size,), jnp.float32, -scale, scale)

    # One-time parameter prep (transposes / bias fuse / embed layout), then the
    # per-call forward is a single pallas_call with no XLA glue.
    params = prepare_lstm_params(embed_table, w_ih, w_hh, b_ih, b_hh)
    params = jax.tree_util.tree_map(jax.block_until_ready, params)

    out = lstm_encoder_forward(seq_ids, params)
    out = jax.block_until_ready(out)

    ref = jax.block_until_ready(
        _reference_forward(seq_ids, embed_table, w_ih, w_hh, b_ih, b_hh))
    assert out.shape == (batch_size, hidden_size)
    np.testing.assert_allclose(np.asarray(out), np.asarray(ref), atol=1e-5, rtol=1e-5)

    print("KERNEL_OK")
</pallas_src>

<mosaic_0001>
module attributes {stable_mosaic.version = 11 : i64} {
  func.func @_lstm_kernel(%arg0: i32, %arg1: memref<2x8xi32, #tpu.memory_space<smem>>, %arg2: memref<50x1x16xf32, #tpu.memory_space<vmem>>, %arg3: memref<16x128xf32, #tpu.memory_space<vmem>>, %arg4: memref<32x128xf32, #tpu.memory_space<vmem>>, %arg5: memref<1x128xf32, #tpu.memory_space<vmem>>, %arg6: memref<2x32xf32, #tpu.memory_space<vmem>>) attributes {dimension_semantics = [#tpu.dimension_semantics<arbitrary>], iteration_bounds = array<i64: 1>, scalar_prefetch = 1 : i64, scratch_operands = 0 : i64, tpu.core_type = #tpu.core_type<tc>, window_params = [{pipeline_mode = #tpu.pipeline_mode<synchronous>, transform_indices = @transform_0, window_bounds = array<i64: 50, 1, 16>}, {pipeline_mode = #tpu.pipeline_mode<synchronous>, transform_indices = @transform_1, window_bounds = array<i64: 16, 128>}, {pipeline_mode = #tpu.pipeline_mode<synchronous>, transform_indices = @transform_2, window_bounds = array<i64: 32, 128>}, {pipeline_mode = #tpu.pipeline_mode<synchronous>, transform_indices = @transform_3, window_bounds = array<i64: 1, 128>}, {pipeline_mode = #tpu.pipeline_mode<synchronous>, transform_indices = @transform_4, window_bounds = array<i64: 2, 32>}]} {
    %c0 = arith.constant 0 : index
    %c0_0 = arith.constant 0 : index
    %0 = memref.load %arg1[%c0, %c0_0] : memref<2x8xi32, #tpu.memory_space<smem>>
    %1 = arith.index_cast %0 : i32 to index
    %c0_1 = arith.constant 0 : index
    %c0_2 = arith.constant 0 : index
    %2 = vector.load %arg2[%1, %c0_1, %c0_2] : memref<50x1x16xf32, #tpu.memory_space<vmem>>, vector<1x1x16xf32>
    %3 = vector.shape_cast %2 : vector<1x1x16xf32> to vector<1x16xf32>
    %c1 = arith.constant 1 : index
    %c0_3 = arith.constant 0 : index
    %4 = memref.load %arg1[%c1, %c0_3] : memref<2x8xi32, #tpu.memory_space<smem>>
    %5 = arith.index_cast %4 : i32 to index
    %c0_4 = arith.constant 0 : index
    %c0_5 = arith.constant 0 : index
    %6 = vector.load %arg2[%5, %c0_4, %c0_5] : memref<50x1x16xf32, #tpu.memory_space<vmem>>, vector<1x1x16xf32>
    %7 = vector.shape_cast %6 : vector<1x1x16xf32> to vector<1x16xf32>
    %c0_6 = arith.constant 0 : index
    %c1_7 = arith.constant 1 : index
    %8 = memref.load %arg1[%c0_6, %c1_7] : memref<2x8xi32, #tpu.memory_space<smem>>
    %9 = arith.index_cast %8 : i32 to index
    %c0_8 = arith.constant 0 : index
    %c0_9 = arith.constant 0 : index
    %10 = vector.load %arg2[%9, %c0_8, %c0_9] : memref<50x1x16xf32, #tpu.memory_space<vmem>>, vector<1x1x16xf32>
    %11 = vector.shape_cast %10 : vector<1x1x16xf32> to vector<1x16xf32>
    %c1_10 = arith.constant 1 : index
    %c1_11 = arith.constant 1 : index
    %12 = memref.load %arg1[%c1_10, %c1_11] : memref<2x8xi32, #tpu.memory_space<smem>>
    %13 = arith.index_cast %12 : i32 to index
    %c0_12 = arith.constant 0 : index
    %c0_13 = arith.constant 0 : index
    %14 = vector.load %arg2[%13, %c0_12, %c0_13] : memref<50x1x16xf32, #tpu.memory_space<vmem>>, vector<1x1x16xf32>
    %15 = vector.shape_cast %14 : vector<1x1x16xf32> to vector<1x16xf32>
    %c0_14 = arith.constant 0 : index
    %c2 = arith.constant 2 : index
    %16 = memref.load %arg1[%c0_14, %c2] : memref<2x8xi32, #tpu.memory_space<smem>>
    %17 = arith.index_cast %16 : i32 to index
    %c0_15 = arith.constant 0 : index
    %c0_16 = arith.constant 0 : index
    %18 = vector.load %arg2[%17, %c0_15, %c0_16] : memref<50x1x16xf32, #tpu.memory_space<vmem>>, vector<1x1x16xf32>
    %19 = vector.shape_cast %18 : vector<1x1x16xf32> to vector<1x16xf32>
    %c1_17 = arith.constant 1 : index
    %c2_18 = arith.constant 2 : index
    %20 = memref.load %arg1[%c1_17, %c2_18] : memref<2x8xi32, #tpu.memory_space<smem>>
    %21 = arith.index_cast %20 : i32 to index
    %c0_19 = arith.constant 0 : index
    %c0_20 = arith.constant 0 : index
    %22 = vector.load %arg2[%21, %c0_19, %c0_20] : memref<50x1x16xf32, #tpu.memory_space<vmem>>, vector<1x1x16xf32>
    %23 = vector.shape_cast %22 : vector<1x1x16xf32> to vector<1x16xf32>
    %c0_21 = arith.constant 0 : index
    %c3 = arith.constant 3 : index
    %24 = memref.load %arg1[%c0_21, %c3] : memref<2x8xi32, #tpu.memory_space<smem>>
    %25 = arith.index_cast %24 : i32 to index
    %c0_22 = arith.constant 0 : index
    %c0_23 = arith.constant 0 : index
    %26 = vector.load %arg2[%25, %c0_22, %c0_23] : memref<50x1x16xf32, #tpu.memory_space<vmem>>, vector<1x1x16xf32>
    %27 = vector.shape_cast %26 : vector<1x1x16xf32> to vector<1x16xf32>
    %c1_24 = arith.constant 1 : index
    %c3_25 = arith.constant 3 : index
    %28 = memref.load %arg1[%c1_24, %c3_25] : memref<2x8xi32, #tpu.memory_space<smem>>
    %29 = arith.index_cast %28 : i32 to index
    %c0_26 = arith.constant 0 : index
    %c0_27 = arith.constant 0 : index
    %30 = vector.load %arg2[%29, %c0_26, %c0_27] : memref<50x1x16xf32, #tpu.memory_space<vmem>>, vector<1x1x16xf32>
    %31 = vector.shape_cast %30 : vector<1x1x16xf32> to vector<1x16xf32>
    %c0_28 = arith.constant 0 : index
    %c4 = arith.constant 4 : index
    %32 = memref.load %arg1[%c0_28, %c4] : memref<2x8xi32, #tpu.memory_space<smem>>
    %33 = arith.index_cast %32 : i32 to index
    %c0_29 = arith.constant 0 : index
    %c0_30 = arith.constant 0 : index
    %34 = vector.load %arg2[%33, %c0_29, %c0_30] : memref<50x1x16xf32, #tpu.memory_space<vmem>>, vector<1x1x16xf32>
    %35 = vector.shape_cast %34 : vector<1x1x16xf32> to vector<1x16xf32>
    %c1_31 = arith.constant 1 : index
    %c4_32 = arith.constant 4 : index
    %36 = memref.load %arg1[%c1_31, %c4_32] : memref<2x8xi32, #tpu.memory_space<smem>>
    %37 = arith.index_cast %36 : i32 to index
    %c0_33 = arith.constant 0 : index
    %c0_34 = arith.constant 0 : index
    %38 = vector.load %arg2[%37, %c0_33, %c0_34] : memref<50x1x16xf32, #tpu.memory_space<vmem>>, vector<1x1x16xf32>
    %39 = vector.shape_cast %38 : vector<1x1x16xf32> to vector<1x16xf32>
    %c0_35 = arith.constant 0 : index
    %c5 = arith.constant 5 : index
    %40 = memref.load %arg1[%c0_35, %c5] : memref<2x8xi32, #tpu.memory_space<smem>>
    %41 = arith.index_cast %40 : i32 to index
    %c0_36 = arith.constant 0 : index
    %c0_37 = arith.constant 0 : index
    %42 = vector.load %arg2[%41, %c0_36, %c0_37] : memref<50x1x16xf32, #tpu.memory_space<vmem>>, vector<1x1x16xf32>
    %43 = vector.shape_cast %42 : vector<1x1x16xf32> to vector<1x16xf32>
    %c1_38 = arith.constant 1 : index
    %c5_39 = arith.constant 5 : index
    %44 = memref.load %arg1[%c1_38, %c5_39] : memref<2x8xi32, #tpu.memory_space<smem>>
    %45 = arith.index_cast %44 : i32 to index
    %c0_40 = arith.constant 0 : index
    %c0_41 = arith.constant 0 : index
    %46 = vector.load %arg2[%45, %c0_40, %c0_41] : memref<50x1x16xf32, #tpu.memory_space<vmem>>, vector<1x1x16xf32>
    %47 = vector.shape_cast %46 : vector<1x1x16xf32> to vector<1x16xf32>
    %c0_42 = arith.constant 0 : index
    %c6 = arith.constant 6 : index
    %48 = memref.load %arg1[%c0_42, %c6] : memref<2x8xi32, #tpu.memory_space<smem>>
    %49 = arith.index_cast %48 : i32 to index
    %c0_43 = arith.constant 0 : index
    %c0_44 = arith.constant 0 : index
    %50 = vector.load %arg2[%49, %c0_43, %c0_44] : memref<50x1x16xf32, #tpu.memory_space<vmem>>, vector<1x1x16xf32>
    %51 = vector.shape_cast %50 : vector<1x1x16xf32> to vector<1x16xf32>
    %c1_45 = arith.constant 1 : index
    %c6_46 = arith.constant 6 : index
    %52 = memref.load %arg1[%c1_45, %c6_46] : memref<2x8xi32, #tpu.memory_space<smem>>
    %53 = arith.index_cast %52 : i32 to index
    %c0_47 = arith.constant 0 : index
    %c0_48 = arith.constant 0 : index
    %54 = vector.load %arg2[%53, %c0_47, %c0_48] : memref<50x1x16xf32, #tpu.memory_space<vmem>>, vector<1x1x16xf32>
    %55 = vector.shape_cast %54 : vector<1x1x16xf32> to vector<1x16xf32>
    %c0_49 = arith.constant 0 : index
    %c7 = arith.constant 7 : index
    %56 = memref.load %arg1[%c0_49, %c7] : memref<2x8xi32, #tpu.memory_space<smem>>
    %57 = arith.index_cast %56 : i32 to index
    %c0_50 = arith.constant 0 : index
    %c0_51 = arith.constant 0 : index
    %58 = vector.load %arg2[%57, %c0_50, %c0_51] : memref<50x1x16xf32, #tpu.memory_space<vmem>>, vector<1x1x16xf32>
    %59 = vector.shape_cast %58 : vector<1x1x16xf32> to vector<1x16xf32>
    %c1_52 = arith.constant 1 : index
    %c7_53 = arith.constant 7 : index
    %60 = memref.load %arg1[%c1_52, %c7_53] : memref<2x8xi32, #tpu.memory_space<smem>>
    %61 = arith.index_cast %60 : i32 to index
    %c0_54 = arith.constant 0 : index
    %c0_55 = arith.constant 0 : index
    %62 = vector.load %arg2[%61, %c0_54, %c0_55] : memref<50x1x16xf32, #tpu.memory_space<vmem>>, vector<1x1x16xf32>
    %63 = vector.shape_cast %62 : vector<1x1x16xf32> to vector<1x16xf32>
    %64 = tpu.concatenate %3, %7, %11, %15, %19, %23, %27, %31, %35, %39, %43, %47, %51, %55, %59, %63 in 0 : vector<1x16xf32>, vector<1x16xf32>, vector<1x16xf32>, vector<1x16xf32>, vector<1x16xf32>, vector<1x16xf32>, vector<1x16xf32>, vector<1x16xf32>, vector<1x16xf32>, vector<1x16xf32>, vector<1x16xf32>, vector<1x16xf32>, vector<1x16xf32>, vector<1x16xf32>, vector<1x16xf32>, vector<1x16xf32> -> vector<16x16xf32>
    %c0_56 = arith.constant 0 : index
    %c0_57 = arith.constant 0 : index
    %65 = vector.load %arg3[%c0_56, %c0_57] : memref<16x128xf32, #tpu.memory_space<vmem>>, vector<16x128xf32>
    %cst = arith.constant dense<0.000000e+00> : vector<16x128xf32>
    %66 = tpu.matmul %64, %65, %cst {dimension_numbers = #tpu.dot_dimension_numbers<[1], [0], [0], [1], [0, 0, 1, 1], [], []>} : vector<16x16xf32>, vector<16x128xf32>, vector<16x128xf32> -> vector<16x128xf32>
    %c0_58 = arith.constant 0 : index
    %c0_59 = arith.constant 0 : index
    %67 = vector.load %arg5[%c0_58, %c0_59] : memref<1x128xf32, #tpu.memory_space<vmem>>, vector<1x128xf32>
    %68 = vector.broadcast %67 : vector<1x128xf32> to vector<16x128xf32>
    %69 = arith.addf %66, %68 : vector<16x128xf32>
    %c0_60 = arith.constant 0 : index
    %c0_61 = arith.constant 0 : index
    %70 = vector.load %arg4[%c0_60, %c0_61] : memref<32x128xf32, #tpu.memory_space<vmem>>, vector<32x128xf32>
    %cst_62 = arith.constant 0.000000e+00 : f32
    %71 = vector.broadcast %cst_62 : f32 to vector<2x32xf32>
    %cst_63 = arith.constant 0.000000e+00 : f32
    %72 = vector.broadcast %cst_63 : f32 to vector<2x32xf32>
    %73 = vector.extract_strided_slice %69 {offsets = [0, 0], sizes = [2, 128], strides = [1, 1]} : vector<16x128xf32> to vector<2x128xf32>
    %cst_64 = arith.constant dense<0.000000e+00> : vector<2x128xf32>
    %74 = tpu.matmul %71, %70, %cst_64 {dimension_numbers = #tpu.dot_dimension_numbers<[1], [0], [0], [1], [0, 0, 1, 1], [], []>} : vector<2x32xf32>, vector<32x128xf32>, vector<2x128xf32> -> vector<2x128xf32>
    %75 = arith.addf %73, %74 : vector<2x128xf32>
    %76 = arith.negf %75 : vector<2x128xf32>
    %77 = math.exp %76 : vector<2x128xf32>
    %cst_65 = arith.constant 1.000000e+00 : f32
    %78 = vector.broadcast %cst_65 : f32 to vector<2x128xf32>
    %79 = arith.addf %78, %77 : vector<2x128xf32>
    %80 = arith.divf %78, %79 : vector<2x128xf32>
    %81 = math.tanh %75 : vector<2x128xf32>
    %82 = vector.extract_strided_slice %80 {offsets = [0, 0], sizes = [2, 32], strides = [1, 1]} : vector<2x128xf32> to vector<2x32xf32>
    %83 = vector.extract_strided_slice %80 {offsets = [0, 32], sizes = [2, 32], strides = [1, 1]} : vector<2x128xf32> to vector<2x32xf32>
    %84 = vector.extract_strided_slice %81 {offsets = [0, 64], sizes = [2, 32], strides = [1, 1]} : vector<2x128xf32> to vector<2x32xf32>
    %85 = vector.extract_strided_slice %80 {offsets = [0, 96], sizes = [2, 32], strides = [1, 1]} : vector<2x128xf32> to vector<2x32xf32>
    %86 = arith.mulf %83, %72 : vector<2x32xf32>
    %87 = arith.mulf %82, %84 : vector<2x32xf32>
    %88 = arith.addf %86, %87 : vector<2x32xf32>
    %89 = math.tanh %88 : vector<2x32xf32>
    %90 = arith.mulf %85, %89 : vector<2x32xf32>
    %91 = vector.extract_strided_slice %69 {offsets = [2, 0], sizes = [2, 128], strides = [1, 1]} : vector<16x128xf32> to vector<2x128xf32>
    %cst_66 = arith.constant dense<0.000000e+00> : vector<2x128xf32>
    %92 = tpu.matmul %90, %70, %cst_66 {dimension_numbers = #tpu.dot_dimension_numbers<[1], [0], [0], [1], [0, 0, 1, 1], [], []>} : vector<2x32xf32>, vector<32x128xf32>, vector<2x128xf32> -> vector<2x128xf32>
    %93 = arith.addf %91, %92 : vector<2x128xf32>
    %94 = arith.negf %93 : vector<2x128xf32>
    %95 = math.exp %94 : vector<2x128xf32>
    %cst_67 = arith.constant 1.000000e+00 : f32
    %96 = vector.broadcast %cst_67 : f32 to vector<2x128xf32>
    %97 = arith.addf %96, %95 : vector<2x128xf32>
    %98 = arith.divf %96, %97 : vector<2x128xf32>
    %99 = math.tanh %93 : vector<2x128xf32>
    %100 = vector.extract_strided_slice %98 {offsets = [0, 0], sizes = [2, 32], strides = [1, 1]} : vector<2x128xf32> to vector<2x32xf32>
    %101 = vector.extract_strided_slice %98 {offsets = [0, 32], sizes = [2, 32], strides = [1, 1]} : vector<2x128xf32> to vector<2x32xf32>
    %102 = vector.extract_strided_slice %99 {offsets = [0, 64], sizes = [2, 32], strides = [1, 1]} : vector<2x128xf32> to vector<2x32xf32>
    %103 = vector.extract_strided_slice %98 {offsets = [0, 96], sizes = [2, 32], strides = [1, 1]} : vector<2x128xf32> to vector<2x32xf32>
    %104 = arith.mulf %101, %88 : vector<2x32xf32>
    %105 = arith.mulf %100, %102 : vector<2x32xf32>
    %106 = arith.addf %104, %105 : vector<2x32xf32>
    %107 = math.tanh %106 : vector<2x32xf32>
    %108 = arith.mulf %103, %107 : vector<2x32xf32>
    %109 = vector.extract_strided_slice %69 {offsets = [4, 0], sizes = [2, 128], strides = [1, 1]} : vector<16x128xf32> to vector<2x128xf32>
    %cst_68 = arith.constant dense<0.000000e+00> : vector<2x128xf32>
    %110 = tpu.matmul %108, %70, %cst_68 {dimension_numbers = #tpu.dot_dimension_numbers<[1], [0], [0], [1], [0, 0, 1, 1], [], []>} : vector<2x32xf32>, vector<32x128xf32>, vector<2x128xf32> -> vector<2x128xf32>
    %111 = arith.addf %109, %110 : vector<2x128xf32>
    %112 = arith.negf %111 : vector<2x128xf32>
    %113 = math.exp %112 : vector<2x128xf32>
    %cst_69 = arith.constant 1.000000e+00 : f32
    %114 = vector.broadcast %cst_69 : f32 to vector<2x128xf32>
    %115 = arith.addf %114, %113 : vector<2x128xf32>
    %116 = arith.divf %114, %115 : vector<2x128xf32>
    %117 = math.tanh %111 : vector<2x128xf32>
    %118 = vector.extract_strided_slice %116 {offsets = [0, 0], sizes = [2, 32], strides = [1, 1]} : vector<2x128xf32> to vector<2x32xf32>
    %119 = vector.extract_strided_slice %116 {offsets = [0, 32], sizes = [2, 32], strides = [1, 1]} : vector<2x128xf32> to vector<2x32xf32>
    %120 = vector.extract_strided_slice %117 {offsets = [0, 64], sizes = [2, 32], strides = [1, 1]} : vector<2x128xf32> to vector<2x32xf32>
    %121 = vector.extract_strided_slice %116 {offsets = [0, 96], sizes = [2, 32], strides = [1, 1]} : vector<2x128xf32> to vector<2x32xf32>
    %122 = arith.mulf %119, %106 : vector<2x32xf32>
    %123 = arith.mulf %118, %120 : vector<2x32xf32>
    %124 = arith.addf %122, %123 : vector<2x32xf32>
    %125 = math.tanh %124 : vector<2x32xf32>
    %126 = arith.mulf %121, %125 : vector<2x32xf32>
    %127 = vector.extract_strided_slice %69 {offsets = [6, 0], sizes = [2, 128], strides = [1, 1]} : vector<16x128xf32> to vector<2x128xf32>
    %cst_70 = arith.constant dense<0.000000e+00> : vector<2x128xf32>
    %128 = tpu.matmul %126, %70, %cst_70 {dimension_numbers = #tpu.dot_dimension_numbers<[1], [0], [0], [1], [0, 0, 1, 1], [], []>} : vector<2x32xf32>, vector<32x128xf32>, vector<2x128xf32> -> vector<2x128xf32>
    %129 = arith.addf %127, %128 : vector<2x128xf32>
    %130 = arith.negf %129 : vector<2x128xf32>
    %131 = math.exp %130 : vector<2x128xf32>
    %cst_71 = arith.constant 1.000000e+00 : f32
    %132 = vector.broadcast %cst_71 : f32 to vector<2x128xf32>
    %133 = arith.addf %132, %131 : vector<2x128xf32>
    %134 = arith.divf %132, %133 : vector<2x128xf32>
    %135 = math.tanh %129 : vector<2x128xf32>
    %136 = vector.extract_strided_slice %134 {offsets = [0, 0], sizes = [2, 32], strides = [1, 1]} : vector<2x128xf32> to vector<2x32xf32>
    %137 = vector.extract_strided_slice %134 {offsets = [0, 32], sizes = [2, 32], strides = [1, 1]} : vector<2x128xf32> to vector<2x32xf32>
    %138 = vector.extract_strided_slice %135 {offsets = [0, 64], sizes = [2, 32], strides = [1, 1]} : vector<2x128xf32> to vector<2x32xf32>
    %139 = vector.extract_strided_slice %134 {offsets = [0, 96], sizes = [2, 32], strides = [1, 1]} : vector<2x128xf32> to vector<2x32xf32>
    %140 = arith.mulf %137, %124 : vector<2x32xf32>
    %141 = arith.mulf %136, %138 : vector<2x32xf32>
    %142 = arith.addf %140, %141 : vector<2x32xf32>
    %143 = math.tanh %142 : vector<2x32xf32>
    %144 = arith.mulf %139, %143 : vector<2x32xf32>
    %145 = vector.extract_strided_slice %69 {offsets = [8, 0], sizes = [2, 128], strides = [1, 1]} : vector<16x128xf32> to vector<2x128xf32>
    %cst_72 = arith.constant dense<0.000000e+00> : vector<2x128xf32>
    %146 = tpu.matmul %144, %70, %cst_72 {dimension_numbers = #tpu.dot_dimension_numbers<[1], [0], [0], [1], [0, 0, 1, 1], [], []>} : vector<2x32xf32>, vector<32x128xf32>, vector<2x128xf32> -> vector<2x128xf32>
    %147 = arith.addf %145, %146 : vector<2x128xf32>
    %148 = arith.negf %147 : vector<2x128xf32>
    %149 = math.exp %148 : vector<2x128xf32>
    %cst_73 = arith.constant 1.000000e+00 : f32
    %150 = vector.broadcast %cst_73 : f32 to vector<2x128xf32>
    %151 = arith.addf %150, %149 : vector<2x128xf32>
    %152 = arith.divf %150, %151 : vector<2x128xf32>
    %153 = math.tanh %147 : vector<2x128xf32>
    %154 = vector.extract_strided_slice %152 {offsets = [0, 0], sizes = [2, 32], strides = [1, 1]} : vector<2x128xf32> to vector<2x32xf32>
    %155 = vector.extract_strided_slice %152 {offsets = [0, 32], sizes = [2, 32], strides = [1, 1]} : vector<2x128xf32> to vector<2x32xf32>
    %156 = vector.extract_strided_slice %153 {offsets = [0, 64], sizes = [2, 32], strides = [1, 1]} : vector<2x128xf32> to vector<2x32xf32>
    %157 = vector.extract_strided_slice %152 {offsets = [0, 96], sizes = [2, 32], strides = [1, 1]} : vector<2x128xf32> to vector<2x32xf32>
    %158 = arith.mulf %155, %142 : vector<2x32xf32>
    %159 = arith.mulf %154, %156 : vector<2x32xf32>
    %160 = arith.addf %158, %159 : vector<2x32xf32>
    %161 = math.tanh %160 : vector<2x32xf32>
    %162 = arith.mulf %157, %161 : vector<2x32xf32>
    %163 = vector.extract_strided_slice %69 {offsets = [10, 0], sizes = [2, 128], strides = [1, 1]} : vector<16x128xf32> to vector<2x128xf32>
    %cst_74 = arith.constant dense<0.000000e+00> : vector<2x128xf32>
    %164 = tpu.matmul %162, %70, %cst_74 {dimension_numbers = #tpu.dot_dimension_numbers<[1], [0], [0], [1], [0, 0, 1, 1], [], []>} : vector<2x32xf32>, vector<32x128xf32>, vector<2x128xf32> -> vector<2x128xf32>
    %165 = arith.addf %163, %164 : vector<2x128xf32>
    %166 = arith.negf %165 : vector<2x128xf32>
    %167 = math.exp %166 : vector<2x128xf32>
    %cst_75 = arith.constant 1.000000e+00 : f32
    %168 = vector.broadcast %cst_75 : f32 to vector<2x128xf32>
    %169 = arith.addf %168, %167 : vector<2x128xf32>
    %170 = arith.divf %168, %169 : vector<2x128xf32>
    %171 = math.tanh %165 : vector<2x128xf32>
    %172 = vector.extract_strided_slice %170 {offsets = [0, 0], sizes = [2, 32], strides = [1, 1]} : vector<2x128xf32> to vector<2x32xf32>
    %173 = vector.extract_strided_slice %170 {offsets = [0, 32], sizes = [2, 32], strides = [1, 1]} : vector<2x128xf32> to vector<2x32xf32>
    %174 = vector.extract_strided_slice %171 {offsets = [0, 64], sizes = [2, 32], strides = [1, 1]} : vector<2x128xf32> to vector<2x32xf32>
    %175 = vector.extract_strided_slice %170 {offsets = [0, 96], sizes = [2, 32], strides = [1, 1]} : vector<2x128xf32> to vector<2x32xf32>
    %176 = arith.mulf %173, %160 : vector<2x32xf32>
    %177 = arith.mulf %172, %174 : vector<2x32xf32>
    %178 = arith.addf %176, %177 : vector<2x32xf32>
    %179 = math.tanh %178 : vector<2x32xf32>
    %180 = arith.mulf %175, %179 : vector<2x32xf32>
    %181 = vector.extract_strided_slice %69 {offsets = [12, 0], sizes = [2, 128], strides = [1, 1]} : vector<16x128xf32> to vector<2x128xf32>
    %cst_76 = arith.constant dense<0.000000e+00> : vector<2x128xf32>
    %182 = tpu.matmul %180, %70, %cst_76 {dimension_numbers = #tpu.dot_dimension_numbers<[1], [0], [0], [1], [0, 0, 1, 1], [], []>} : vector<2x32xf32>, vector<32x128xf32>, vector<2x128xf32> -> vector<2x128xf32>
    %183 = arith.addf %181, %182 : vector<2x128xf32>
    %184 = arith.negf %183 : vector<2x128xf32>
    %185 = math.exp %184 : vector<2x128xf32>
    %cst_77 = arith.constant 1.000000e+00 : f32
    %186 = vector.broadcast %cst_77 : f32 to vector<2x128xf32>
    %187 = arith.addf %186, %185 : vector<2x128xf32>
    %188 = arith.divf %186, %187 : vector<2x128xf32>
    %189 = math.tanh %183 : vector<2x128xf32>
    %190 = vector.extract_strided_slice %188 {offsets = [0, 0], sizes = [2, 32], strides = [1, 1]} : vector<2x128xf32> to vector<2x32xf32>
    %191 = vector.extract_strided_slice %188 {offsets = [0, 32], sizes = [2, 32], strides = [1, 1]} : vector<2x128xf32> to vector<2x32xf32>
    %192 = vector.extract_strided_slice %189 {offsets = [0, 64], sizes = [2, 32], strides = [1, 1]} : vector<2x128xf32> to vector<2x32xf32>
    %193 = vector.extract_strided_slice %188 {offsets = [0, 96], sizes = [2, 32], strides = [1, 1]} : vector<2x128xf32> to vector<2x32xf32>
    %194 = arith.mulf %191, %178 : vector<2x32xf32>
    %195 = arith.mulf %190, %192 : vector<2x32xf32>
    %196 = arith.addf %194, %195 : vector<2x32xf32>
    %197 = math.tanh %196 : vector<2x32xf32>
    %198 = arith.mulf %193, %197 : vector<2x32xf32>
    %199 = vector.extract_strided_slice %69 {offsets = [14, 0], sizes = [2, 128], strides = [1, 1]} : vector<16x128xf32> to vector<2x128xf32>
    %cst_78 = arith.constant dense<0.000000e+00> : vector<2x128xf32>
    %200 = tpu.matmul %198, %70, %cst_78 {dimension_numbers = #tpu.dot_dimension_numbers<[1], [0], [0], [1], [0, 0, 1, 1], [], []>} : vector<2x32xf32>, vector<32x128xf32>, vector<2x128xf32> -> vector<2x128xf32>
    %201 = arith.addf %199, %200 : vector<2x128xf32>
    %202 = arith.negf %201 : vector<2x128xf32>
    %203 = math.exp %202 : vector<2x128xf32>
    %cst_79 = arith.constant 1.000000e+00 : f32
    %204 = vector.broadcast %cst_79 : f32 to vector<2x128xf32>
    %205 = arith.addf %204, %203 : vector<2x128xf32>
    %206 = arith.divf %204, %205 : vector<2x128xf32>
    %207 = math.tanh %201 : vector<2x128xf32>
    %208 = vector.extract_strided_slice %206 {offsets = [0, 0], sizes = [2, 32], strides = [1, 1]} : vector<2x128xf32> to vector<2x32xf32>
    %209 = vector.extract_strided_slice %206 {offsets = [0, 32], sizes = [2, 32], strides = [1, 1]} : vector<2x128xf32> to vector<2x32xf32>
    %210 = vector.extract_strided_slice %207 {offsets = [0, 64], sizes = [2, 32], strides = [1, 1]} : vector<2x128xf32> to vector<2x32xf32>
    %211 = vector.extract_strided_slice %206 {offsets = [0, 96], sizes = [2, 32], strides = [1, 1]} : vector<2x128xf32> to vector<2x32xf32>
    %212 = arith.mulf %209, %196 : vector<2x32xf32>
    %213 = arith.mulf %208, %210 : vector<2x32xf32>
    %214 = arith.addf %212, %213 : vector<2x32xf32>
    %215 = math.tanh %214 : vector<2x32xf32>
    %216 = arith.mulf %211, %215 : vector<2x32xf32>
    %c0_80 = arith.constant 0 : index
    %c0_81 = arith.constant 0 : index
    %217 = vector.load %arg6[%c0_80, %c0_81] : memref<2x32xf32, #tpu.memory_space<vmem>>, vector<2x32xf32>
    tpu.vector_store %arg6[%c0_80, %c0_81], %216 {strides = array<i32>} : memref<2x32xf32, #tpu.memory_space<vmem>>, vector<2x32xf32>,
    return
  }
  func.func @transform_0(%arg0: i32, %arg1: memref<2x8xi32, #tpu.memory_space<smem>>) -> (i32, i32, i32) {
    %c0_i32 = arith.constant 0 : i32
    %c0_i32_0 = arith.constant 0 : i32
    %c0_i32_1 = arith.constant 0 : i32
    %c0_i32_2 = arith.constant 0 : i32
    return %c0_i32, %c0_i32_0, %c0_i32_1 : i32, i32, i32
  }
  func.func @transform_1(%arg0: i32, %arg1: memref<2x8xi32, #tpu.memory_space<smem>>) -> (i32, i32) {
    %c0_i32 = arith.constant 0 : i32
    %c0_i32_0 = arith.constant 0 : i32
    %c0_i32_1 = arith.constant 0 : i32
    return %c0_i32, %c0_i32_0 : i32, i32
  }
  func.func @transform_2(%arg0: i32, %arg1: memref<2x8xi32, #tpu.memory_space<smem>>) -> (i32, i32) {
    %c0_i32 = arith.constant 0 : i32
    %c0_i32_0 = arith.constant 0 : i32
    %c0_i32_1 = arith.constant 0 : i32
    return %c0_i32, %c0_i32_0 : i32, i32
  }
  func.func @transform_3(%arg0: i32, %arg1: memref<2x8xi32, #tpu.memory_space<smem>>) -> (i32, i32) {
    %c0_i32 = arith.constant 0 : i32
    %c0_i32_0 = arith.constant 0 : i32
    %c0_i32_1 = arith.constant 0 : i32
    return %c0_i32, %c0_i32_0 : i32, i32
  }
  func.func @transform_4(%arg0: i32, %arg1: memref<2x8xi32, #tpu.memory_space<smem>>) -> (i32, i32) {
    %c0_i32 = arith.constant 0 : i32
    %c0_i32_0 = arith.constant 0 : i32
    %c0_i32_1 = arith.constant 0 : i32
    return %c0_i32, %c0_i32_0 : i32, i32
  }
}

</mosaic_0001>

<llo_original>
// kernel: tpu_custom_call.1
$region0: #{tpu_custom_call.1}
  #allocation0 [shape = 'u32[]', space=smem, size = 0x4, offset = 0x4, fixed_abs, tag = 'smem constant byte address 0x4 - core index']
  #allocation1 [shape = 'u32[144,128]{1,0:T(1,128)}', space=vmem, size = 0x12000, scoped, tag = 'internal scratch']
  #allocation2 [shape = 's32[1]{0}', space=sflag, size = 0x4, scoped, tag = 'scoped memory for tpu_custom_call.1']
  #allocation3 [shape = 'u8[1024]{0}', space=smem, size = 0x400, scoped, tag = 'prefetched SMEM operand 0']
  %s0 = inlined_call_operand.vmem [shape: s32[2,8], index: 0, kind: input, shape index: {}]
  %s1 = inlined_call_operand.vmem [shape: f32[50,1,16], index: 1, kind: input, shape index: {}]
  %s2 = inlined_call_operand.vmem [shape: f32[16,128], index: 2, kind: input, shape index: {}]
  %s3 = inlined_call_operand.vmem [shape: f32[32,128], index: 3, kind: input, shape index: {}]
  %s4 = inlined_call_operand.vmem [shape: f32[1,128], index: 4, kind: input, shape index: {}]
  %s5 = inlined_call_operand.hbm [shape: f32[2,32], index: 5, kind: output, shape index: {}]
  %s6 = sld [smem:[#allocation0]]
  $region26: #{tpu_custom_call.1} parent=0
    _
  %s8 = ssub.s32 1, %s6
  %s9 = scalar_select 0, %s8, %s6
  %s10 = sshll.u32 %s0, 4
  %s11 = int_to_ptr.vmem [resolvable:$true] %s10
  %13 = dma.vmem_to_smem %s11, 32, [#allocation3], [#allocation2]
  %14 = dma.done [#allocation2], 32
  %15 = sfence
  $region1: #{tpu_custom_call.1} parent=0
    #allocation4 [shape = 'u8[1024]{0}', space=vmem, size = 0x400, scoped, tag = 'output window, operand 0, single buffered']
    #allocation5 [shape = 's32[1]{0}', space=sflag, size = 0x4, scoped, tag = 'scoped memory for tpu_custom_call.1']
    %16 = vsyncpa [#allocation5], 0
    // Predicated region
    $region2: #{tpu_custom_call.1} parent=1 // pred_check
      _
    $region3: #{tpu_custom_call.1} parent=1 // pred_check_branch
      %18 = sbr.rel (0) target = $region5
    $region4: #{tpu_custom_call.1} parent=1 // pred_region
      _
    $region5: #{tpu_custom_call.1} parent=1 // pred_fallthru
      _
    // Predicated region
    $region6: #{tpu_custom_call.1} parent=1 // pred_check
      _
    $region7: #{tpu_custom_call.1} parent=1 // pred_check_branch
      %20 = sbr.rel (0) target = $region9
    $region8: #{tpu_custom_call.1} parent=1 // pred_region
      _
    $region9: #{tpu_custom_call.1} parent=1 // pred_fallthru
      _
    // Predicated region
    $region10: #{tpu_custom_call.1} parent=1 // pred_check
      _
    $region11: #{tpu_custom_call.1} parent=1 // pred_check_branch
      %22 = sbr.rel (0) target = $region13
    $region12: #{tpu_custom_call.1} parent=1 // pred_region
      _
    $region13: #{tpu_custom_call.1} parent=1 // pred_fallthru
      _
    // Predicated region
    $region14: #{tpu_custom_call.1} parent=1 // pred_check
      _
    $region15: #{tpu_custom_call.1} parent=1 // pred_check_branch
      %24 = sbr.rel (0) target = $region17
    $region16: #{tpu_custom_call.1} parent=1 // pred_region
      _
    $region17: #{tpu_custom_call.1} parent=1 // pred_fallthru
      _
    %s25 = sld [smem:[#allocation3]]
    %s26 = scalar_lea.vmem %s1, %s25
    %v27 = vld [vmem:[%s26] sm:$0x1]
    %s28 = sld [smem:[#allocation3 + $0x80]]
    %s29 = scalar_lea.vmem %s1, %s28
    %v30 = vld [vmem:[%s29] sm:$0x1]
    %s31 = sld [smem:[#allocation3 + $0x1]]
    %s32 = scalar_lea.vmem %s1, %s31
    %v33 = vld [vmem:[%s32] sm:$0x1]
    %s34 = sld [smem:[#allocation3 + $0x81]]
    %s35 = scalar_lea.vmem %s1, %s34
    %v36 = vld [vmem:[%s35] sm:$0x1]
    %s37 = sld [smem:[#allocation3 + $0x2]]
    %s38 = scalar_lea.vmem %s1, %s37
    %v39 = vld [vmem:[%s38] sm:$0x1]
    %s40 = sld [smem:[#allocation3 + $0x82]]
    %s41 = scalar_lea.vmem %s1, %s40
    %v42 = vld [vmem:[%s41] sm:$0x1]
    %s43 = sld [smem:[#allocation3 + $0x3]]
    %s44 = scalar_lea.vmem %s1, %s43
    %v45 = vld [vmem:[%s44] sm:$0x1]
    %s46 = sld [smem:[#allocation3 + $0x83]]
    %s47 = scalar_lea.vmem %s1, %s46
    %v48 = vld [vmem:[%s47] sm:$0x1]
    %s49 = sld [smem:[#allocation3 + $0x4]]
    %s50 = scalar_lea.vmem %s1, %s49
    %v51 = vld [vmem:[%s50] sm:$0x1]
    %s52 = sld [smem:[#allocation3 + $0x84]]
    %s53 = scalar_lea.vmem %s1, %s52
    %v54 = vld [vmem:[%s53] sm:$0x1]
    %s55 = sld [smem:[#allocation3 + $0x5]]
    %s56 = scalar_lea.vmem %s1, %s55
    %v57 = vld [vmem:[%s56] sm:$0x1]
    %s58 = sld [smem:[#allocation3 + $0x85]]
    %s59 = scalar_lea.vmem %s1, %s58
    %v60 = vld [vmem:[%s59] sm:$0x1]
    %s61 = sld [smem:[#allocation3 + $0x6]]
    %s62 = scalar_lea.vmem %s1, %s61
    %v63 = vld [vmem:[%s62] sm:$0x1]
    %s64 = sld [smem:[#allocation3 + $0x86]]
    %s65 = scalar_lea.vmem %s1, %s64
    %v66 = vld [vmem:[%s65] sm:$0x1]
    %s67 = sld [smem:[#allocation3 + $0x7]]
    %s68 = scalar_lea.vmem %s1, %s67
    %v69 = vld [vmem:[%s68] sm:$0x1]
    %s70 = sld [smem:[#allocation3 + $0x87]]
    %s71 = scalar_lea.vmem %s1, %s70
    %v72 = vld [vmem:[%s71] sm:$0x1]
    %v74 = vlaneseq
    %v75 = vshrl.u32 %v74, 7
    %v76 = vsub.s32 0, %v75
    %v77 = vrot.slane %v30, %v76
    %v80 = vlaneseq
    %v81 = vshrl.u32 %v80, 7
    %v82 = vsub.s32 0, %v81
    %v83 = vrot.slane %v33, %v82
    %v86 = vlaneseq
    %v87 = vshrl.u32 %v86, 7
    %v88 = vsub.s32 0, %v87
    %v89 = vrot.slane %v36, %v88
    %v92 = vlaneseq
    %v93 = vshrl.u32 %v92, 7
    %v94 = vsub.s32 0, %v93
    %v95 = vrot.slane %v39, %v94
    %v98 = vlaneseq
    %v99 = vshrl.u32 %v98, 7
    %v100 = vsub.s32 0, %v99
    %v101 = vrot.slane %v42, %v100
    %v104 = vlaneseq
    %v105 = vshrl.u32 %v104, 7
    %v106 = vsub.s32 0, %v105
    %v107 = vrot.slane %v45, %v106
    %v110 = vlaneseq
    %v111 = vshrl.u32 %v110, 7
    %v112 = vsub.s32 0, %v111
    %v113 = vrot.slane %v48, %v112
    %v116 = vlaneseq
    %v117 = vshrl.u32 %v116, 7
    %v118 = vsub.s32 0, %v117
    %v119 = vrot.slane %v54, %v118
    %v122 = vlaneseq
    %v123 = vshrl.u32 %v122, 7
    %v124 = vsub.s32 0, %v123
    %v125 = vrot.slane %v57, %v124
    %v128 = vlaneseq
    %v129 = vshrl.u32 %v128, 7
    %v130 = vsub.s32 0, %v129
    %v131 = vrot.slane %v60, %v130
    %v134 = vlaneseq
    %v135 = vshrl.u32 %v134, 7
    %v136 = vsub.s32 0, %v135
    %v137 = vrot.slane %v63, %v136
    %v140 = vlaneseq
    %v141 = vshrl.u32 %v140, 7
    %v142 = vsub.s32 0, %v141
    %v143 = vrot.slane %v66, %v142
    %v146 = vlaneseq
    %v147 = vshrl.u32 %v146, 7
    %v148 = vsub.s32 0, %v147
    %v149 = vrot.slane %v69, %v148
    %v152 = vlaneseq
    %v153 = vshrl.u32 %v152, 7
    %v154 = vsub.s32 0, %v153
    %v155 = vrot.slane %v72, %v154
    %vm157 = vcmask 1040384
    %v158 = vsel %vm157, %v27, %v77
    %vm159 = vcmask 1041408
    %v160 = vsel %vm159, %v158, %v83
    %vm161 = vcmask 1042432
    %v162 = vsel %vm161, %v160, %v89
    %vm163 = vcmask 1043456
    %v164 = vsel %vm163, %v162, %v95
    %vm165 = vcmask 1044480
    %v166 = vsel %vm165, %v164, %v101
    %vm167 = vcmask 1045504
    %v168 = vsel %vm167, %v166, %v107
    %vm169 = vcmask 1046528
    %v170 = vsel %vm169, %v168, %v113
    %v171 = vsel %vm157, %v51, %v119
    %v172 = vsel %vm159, %v171, %v125
    %v173 = vsel %vm161, %v172, %v131
    %v174 = vsel %vm163, %v173, %v137
    %v175 = vsel %vm165, %v174, %v143
    %v176 = vsel %vm167, %v175, %v149
    %v177 = vsel %vm169, %v176, %v155
    %v178 = vld [vmem:[%s2] sm:$0xff]
    %v179 = vld [vmem:[%s2 + $0x8] sm:$0xff]
    %v180 = vld [vmem:[%s4] sm:$0x1]
    %v182 = vlaneseq
    %v183 = vshrl.u32 %v182, 7
    %v184 = vsub.s32 0, %v183
    %v185 = vrot.slane %v180, %v184
    %vm187 = vcmask 130048
    %v189 = vsel %vm187, %v170, 0
    %v192 = vsel %vm187, %v177, 0
    %194 = vmatprep.subr.mxu0 0.0
    %195 = vmatpush1.msra.mxu0 0.0
    %196 = vmatprep.subr.mxu0 0.0
    %197 = vmatpush1.msra.mxu0 0.0
    %198 = vmatprep.subr.mxu0 0.0
    %199 = vmatpush1.msra.mxu0 0.0
    %200 = vmatprep.subr.mxu0 0.0
    %201 = vmatpush1.msra.mxu0 0.0
    %202 = vmatprep.subr.mxu0 0.0
    %203 = vmatpush1.msra.mxu0 0.0
    %204 = vmatprep.subr.mxu0 0.0
    %205 = vmatpush1.msra.mxu0 0.0
    %206 = vmatprep.subr.mxu0 0.0
    %207 = vmatpush1.msra.mxu0 0.0
    %208 = vmatprep.subr.mxu0 0.0
    %209 = vmatpush1.msra.mxu0 0.0
    %210 = vmatprep.subr.mxu0 0.0
    %211 = vmatpush1.msra.mxu0 0.0
    %212 = vmatprep.subr.mxu0 0.0
    %213 = vmatpush1.msra.mxu0 0.0
    %214 = vmatprep.subr.mxu0 0.0
    %215 = vmatpush1.msra.mxu0 0.0
    %216 = vmatprep.subr.mxu0 0.0
    %217 = vmatpush1.msra.mxu0 0.0
    %218 = vmatprep.subr.mxu0 0.0
    %219 = vmatpush1.msra.mxu0 0.0
    %220 = vmatprep.subr.mxu0 0.0
    %221 = vmatpush1.msra.mxu0 0.0
    %222 = vmatprep.subr.mxu0 0.0
    %223 = vmatpush1.msra.mxu0 %v179
    %224 = vmatprep.subr.mxu0 0.0
    %225 = vmatpush1.msra.mxu0 %v178
    %226 = vmatprep.subr.mxu0 0.0
    %227 = vmatpush2.msra.mxu0 0.0
    %228 = vmatprep.subr.mxu0 0.0
    %229 = vmatpush2.msra.mxu0 0.0
    %230 = vmatprep.subr.mxu0 0.0
    %231 = vmatpush2.msra.mxu0 0.0
    %232 = vmatprep.subr.mxu0 0.0
    %233 = vmatpush2.msra.mxu0 0.0
    %234 = vmatprep.subr.mxu0 0.0
    %235 = vmatpush2.msra.mxu0 0.0
    %236 = vmatprep.subr.mxu0 0.0
    %237 = vmatpush2.msra.mxu0 0.0
    %238 = vmatprep.subr.mxu0 0.0
    %239 = vmatpush2.msra.mxu0 0.0
    %240 = vmatprep.subr.mxu0 0.0
    %241 = vmatpush2.msra.mxu0 0.0
    %242 = vmatprep.subr.mxu0 0.0
    %243 = vmatpush2.msra.mxu0 0.0
    %244 = vmatprep.subr.mxu0 0.0
    %245 = vmatpush2.msra.mxu0 0.0
    %246 = vmatprep.subr.mxu0 0.0
    %247 = vmatpush2.msra.mxu0 0.0
    %248 = vmatprep.subr.mxu0 0.0
    %249 = vmatpush2.msra.mxu0 0.0
    %250 = vmatprep.subr.mxu0 0.0
    %251 = vmatpush2.msra.mxu0 0.0
    %252 = vmatprep.subr.mxu0 0.0
    %253 = vmatpush2.msra.mxu0 0.0
    %254 = vmatprep.subr.mxu0 0.0
    %255 = vmatpush2.msra.mxu0 0.0
    %256 = vmatprep.subr.mxu0 0.0
    %257 = vmatpush2.msra.mxu0 0.0
    %258 = vmatprep.mubr.f32.mxu0 0.0
    %259 = vmatmul.mubr.f32.gmra.mxu0 %v189
    %v260 = vpop.f32.mrf.mxu0
    %v261 = vadd.f32 %v185, %v260
    %v262 = vpop.f32.mrf.mxu0
    %263 = vmatprep.mubr.f32.mxu0 0.0
    %264 = vmatmul.mubr.f32.gmra.mxu0 %v192
    %v265 = vpop.f32.mrf.mxu0
    %v266 = vadd.f32 %v185, %v265
    %v267 = vpop.f32.mrf.mxu0
    %268 = vdwg.mxu0
    %v269 = vld [vmem:[%s3] sm:$0xff]
    %v270 = vld [vmem:[%s3 + $0x8] sm:$0xff]
    %v271 = vld [vmem:[%s3 + $0x10] sm:$0xff]
    %v272 = vld [vmem:[%s3 + $0x18] sm:$0xff]
    %vm273 = vcmask 261120
    %v275 = vsel %vm273, 0.0, 0
    %277 = vmatprep.subr.mxu0 0.0
    %278 = vmatpush1.msra.mxu0 0.0
    %279 = vmatprep.subr.mxu0 0.0
    %280 = vmatpush1.msra.mxu0 0.0
    %281 = vmatprep.subr.mxu0 0.0
    %282 = vmatpush1.msra.mxu0 0.0
    %283 = vmatprep.subr.mxu0 0.0
    %284 = vmatpush1.msra.mxu0 0.0
    %285 = vmatprep.subr.mxu0 0.0
    %286 = vmatpush1.msra.mxu0 0.0
    %287 = vmatprep.subr.mxu0 0.0
    %288 = vmatpush1.msra.mxu0 0.0
    %289 = vmatprep.subr.mxu0 0.0
    %290 = vmatpush1.msra.mxu0 0.0
    %291 = vmatprep.subr.mxu0 0.0
    %292 = vmatpush1.msra.mxu0 0.0
    %293 = vmatprep.subr.mxu0 0.0
    %294 = vmatpush1.msra.mxu0 0.0
    %295 = vmatprep.subr.mxu0 0.0
    %296 = vmatpush1.msra.mxu0 0.0
    %297 = vmatprep.subr.mxu0 0.0
    %298 = vmatpush1.msra.mxu0 0.0
    %299 = vmatprep.subr.mxu0 0.0
    %300 = vmatpush1.msra.mxu0 0.0
    %301 = vmatprep.subr.mxu0 0.0
    %302 = vmatpush1.msra.mxu0 %v272
    %303 = vmatprep.subr.mxu0 0.0
    %304 = vmatpush1.msra.mxu0 %v271
    %305 = vmatprep.subr.mxu0 0.0
    %306 = vmatpush1.msra.mxu0 %v270
    %307 = vmatprep.subr.mxu0 0.0
    %308 = vmatpush1.msra.mxu0 %v269
    %309 = vmatprep.subr.mxu0 0.0
    %310 = vmatpush2.msra.mxu0 0.0
    %311 = vmatprep.subr.mxu0 0.0
    %312 = vmatpush2.msra.mxu0 0.0
    %313 = vmatprep.subr.mxu0 0.0
    %314 = vmatpush2.msra.mxu0 0.0
    %315 = vmatprep.subr.mxu0 0.0
    %316 = vmatpush2.msra.mxu0 0.0
    %317 = vmatprep.subr.mxu0 0.0
    %318 = vmatpush2.msra.mxu0 0.0
    %319 = vmatprep.subr.mxu0 0.0
    %320 = vmatpush2.msra.mxu0 0.0
    %321 = vmatprep.subr.mxu0 0.0
    %322 = vmatpush2.msra.mxu0 0.0
    %323 = vmatprep.subr.mxu0 0.0
    %324 = vmatpush2.msra.mxu0 0.0
    %325 = vmatprep.subr.mxu0 0.0
    %326 = vmatpush2.msra.mxu0 0.0
    %327 = vmatprep.subr.mxu0 0.0
    %328 = vmatpush2.msra.mxu0 0.0
    %329 = vmatprep.subr.mxu0 0.0
    %330 = vmatpush2.msra.mxu0 0.0
    %331 = vmatprep.subr.mxu0 0.0
    %332 = vmatpush2.msra.mxu0 0.0
    %333 = vmatprep.subr.mxu0 0.0
    %334 = vmatpush2.msra.mxu0 0.0
    %335 = vmatprep.subr.mxu0 0.0
    %336 = vmatpush2.msra.mxu0 0.0
    %337 = vmatprep.subr.mxu0 0.0
    %338 = vmatpush2.msra.mxu0 0.0
    %339 = vmatprep.subr.mxu0 0.0
    %340 = vmatpush2.msra.mxu0 0.0
    %341 = vmatprep.mubr.f32.mxu0 0.0
    %342 = vmatmul.mubr.f32.gmra.mxu0 %v275
    %v343 = vpop.f32.mrf.mxu0
    %v344 = vadd.f32 0.0, %v343
    %v345 = vpop.f32.mrf.mxu0
    %346 = vdwg.mxu0
    %v347 = vadd.f32 %v261, %v344
    %v348 = vxor.u32 %v347, 2147483648
    %v349 = vmul.f32 %v348, 1.442695
    %v350 = vpow.pop %v349
    %v351 = vadd.f32 %v350, 1.0
    %v352 = vrcp.pop %v351
    %v353 = vmul.f32 1.0, %v352
    %v354 = vtanh.pop %v347
    %v355 = vmul.f32 %v353, 0.0
    %357 = vrot.lane.b32.xlu0 %v354, 64
    %v358 = vpop.permute.xlu0 %357
    %v360 = vmul.f32 %v353, %v358
    %362 = vrot.lane.b32.xlu0 %v360, 32
    %v363 = vpop.permute.xlu0 %362
    %v365 = vadd.f32 %v355, %v363
    %v366 = vtanh.pop %v365
    %368 = vrot.lane.b32.xlu0 %v366, 64
    %v369 = vpop.permute.xlu0 %368
    %v371 = vmul.f32 %v353, %v369
    %373 = vrot.lane.b32.xlu0 %v371, 32
    %v374 = vpop.permute.xlu0 %373
    %v375 = vsel %vm273, %v374, 0
    %377 = vmatprep.subr.mxu0 0.0
    %378 = vmatpush1.msra.mxu0 0.0
    %379 = vmatprep.subr.mxu0 0.0
    %380 = vmatpush1.msra.mxu0 0.0
    %381 = vmatprep.subr.mxu0 0.0
    %382 = vmatpush1.msra.mxu0 0.0
    %383 = vmatprep.subr.mxu0 0.0
    %384 = vmatpush1.msra.mxu0 0.0
    %385 = vmatprep.subr.mxu0 0.0
    %386 = vmatpush1.msra.mxu0 0.0
    %387 = vmatprep.subr.mxu0 0.0
    %388 = vmatpush1.msra.mxu0 0.0
    %389 = vmatprep.subr.mxu0 0.0
    %390 = vmatpush1.msra.mxu0 0.0
    %391 = vmatprep.subr.mxu0 0.0
    %392 = vmatpush1.msra.mxu0 0.0
    %393 = vmatprep.subr.mxu0 0.0
    %394 = vmatpush1.msra.mxu0 0.0
    %395 = vmatprep.subr.mxu0 0.0
    %396 = vmatpush1.msra.mxu0 0.0
    %397 = vmatprep.subr.mxu0 0.0
    %398 = vmatpush1.msra.mxu0 0.0
    %399 = vmatprep.subr.mxu0 0.0
    %400 = vmatpush1.msra.mxu0 0.0
    %401 = vmatprep.subr.mxu0 0.0
    %402 = vmatpush1.msra.mxu0 %v272
    %403 = vmatprep.subr.mxu0 0.0
    %404 = vmatpush1.msra.mxu0 %v271
    %405 = vmatprep.subr.mxu0 0.0
    %406 = vmatpush1.msra.mxu0 %v270
    %407 = vmatprep.subr.mxu0 0.0
    %408 = vmatpush1.msra.mxu0 %v269
    %409 = vmatprep.subr.mxu0 0.0
    %410 = vmatpush2.msra.mxu0 0.0
    %411 = vmatprep.subr.mxu0 0.0
    %412 = vmatpush2.msra.mxu0 0.0
    %413 = vmatprep.subr.mxu0 0.0
    %414 = vmatpush2.msra.mxu0 0.0
    %415 = vmatprep.subr.mxu0 0.0
    %416 = vmatpush2.msra.mxu0 0.0
    %417 = vmatprep.subr.mxu0 0.0
    %418 = vmatpush2.msra.mxu0 0.0
    %419 = vmatprep.subr.mxu0 0.0
    %420 = vmatpush2.msra.mxu0 0.0
    %421 = vmatprep.subr.mxu0 0.0
    %422 = vmatpush2.msra.mxu0 0.0
    %423 = vmatprep.subr.mxu0 0.0
    %424 = vmatpush2.msra.mxu0 0.0
    %425 = vmatprep.subr.mxu0 0.0
    %426 = vmatpush2.msra.mxu0 0.0
    %427 = vmatprep.subr.mxu0 0.0
    %428 = vmatpush2.msra.mxu0 0.0
    %429 = vmatprep.subr.mxu0 0.0
    %430 = vmatpush2.msra.mxu0 0.0
    %431 = vmatprep.subr.mxu0 0.0
    %432 = vmatpush2.msra.mxu0 0.0
    %433 = vmatprep.subr.mxu0 0.0
    %434 = vmatpush2.msra.mxu0 0.0
    %435 = vmatprep.subr.mxu0 0.0
    %436 = vmatpush2.msra.mxu0 0.0
    %437 = vmatprep.subr.mxu0 0.0
    %438 = vmatpush2.msra.mxu0 0.0
    %439 = vmatprep.subr.mxu0 0.0
    %440 = vmatpush2.msra.mxu0 0.0
    %441 = vmatprep.mubr.f32.mxu0 0.0
    %442 = vmatmul.mubr.f32.gmra.mxu0 %v375
    %v443 = vpop.f32.mrf.mxu0
    %v444 = vadd.f32 0.0, %v443
    %v445 = vpop.f32.mrf.mxu0
    %446 = vdwg.mxu0
    %v448 = vrot.slane %v444, 6
    %v450 = vadd.f32 %v261, %v448
    %v451 = vxor.u32 %v450, 2147483648
    %v452 = vmul.f32 %v451, 1.442695
    %v453 = vpow.pop %v452
    %v454 = vadd.f32 %v453, 1.0
    %v455 = vrcp.pop %v454
    %v456 = vmul.f32 1.0, %v455
    %v457 = vtanh.pop %v450
    %v459 = vrot.slane %v365, 6
    %v461 = vmul.f32 %v456, %v459
    %463 = vrot.lane.b32.xlu0 %v457, 64
    %v464 = vpop.permute.xlu0 %463
    %v466 = vmul.f32 %v456, %v464
    %468 = vrot.lane.b32.xlu0 %v466, 32
    %v469 = vpop.permute.xlu0 %468
    %v471 = vadd.f32 %v461, %v469
    %v472 = vtanh.pop %v471
    %474 = vrot.lane.b32.xlu0 %v472, 64
    %v475 = vpop.permute.xlu0 %474
    %v477 = vmul.f32 %v456, %v475
    %v479 = vrot.slane %v477, 2
    %480 = vrot.lane.b32.xlu0 %v479, 32
    %v481 = vpop.permute.xlu0 %480
    %v482 = vsel %vm273, %v481, 0
    %484 = vmatprep.subr.mxu0 0.0
    %485 = vmatpush1.msra.mxu0 0.0
    %486 = vmatprep.subr.mxu0 0.0
    %487 = vmatpush1.msra.mxu0 0.0
    %488 = vmatprep.subr.mxu0 0.0
    %489 = vmatpush1.msra.mxu0 0.0
    %490 = vmatprep.subr.mxu0 0.0
    %491 = vmatpush1.msra.mxu0 0.0
    %492 = vmatprep.subr.mxu0 0.0
    %493 = vmatpush1.msra.mxu0 0.0
    %494 = vmatprep.subr.mxu0 0.0
    %495 = vmatpush1.msra.mxu0 0.0
    %496 = vmatprep.subr.mxu0 0.0
    %497 = vmatpush1.msra.mxu0 0.0
    %498 = vmatprep.subr.mxu0 0.0
    %499 = vmatpush1.msra.mxu0 0.0
    %500 = vmatprep.subr.mxu0 0.0
    %501 = vmatpush1.msra.mxu0 0.0
    %502 = vmatprep.subr.mxu0 0.0
    %503 = vmatpush1.msra.mxu0 0.0
    %504 = vmatprep.subr.mxu0 0.0
    %505 = vmatpush1.msra.mxu0 0.0
    %506 = vmatprep.subr.mxu0 0.0
    %507 = vmatpush1.msra.mxu0 0.0
    %508 = vmatprep.subr.mxu0 0.0
    %509 = vmatpush1.msra.mxu0 %v272
    %510 = vmatprep.subr.mxu0 0.0
    %511 = vmatpush1.msra.mxu0 %v271
    %512 = vmatprep.subr.mxu0 0.0
    %513 = vmatpush1.msra.mxu0 %v270
    %514 = vmatprep.subr.mxu0 0.0
    %515 = vmatpush1.msra.mxu0 %v269
    %516 = vmatprep.subr.mxu0 0.0
    %517 = vmatpush2.msra.mxu0 0.0
    %518 = vmatprep.subr.mxu0 0.0
    %519 = vmatpush2.msra.mxu0 0.0
    %520 = vmatprep.subr.mxu0 0.0
    %521 = vmatpush2.msra.mxu0 0.0
    %522 = vmatprep.subr.mxu0 0.0
    %523 = vmatpush2.msra.mxu0 0.0
    %524 = vmatprep.subr.mxu0 0.0
    %525 = vmatpush2.msra.mxu0 0.0
    %526 = vmatprep.subr.mxu0 0.0
    %527 = vmatpush2.msra.mxu0 0.0
    %528 = vmatprep.subr.mxu0 0.0
    %529 = vmatpush2.msra.mxu0 0.0
    %530 = vmatprep.subr.mxu0 0.0
    %531 = vmatpush2.msra.mxu0 0.0
    %532 = vmatprep.subr.mxu0 0.0
    %533 = vmatpush2.msra.mxu0 0.0
    %534 = vmatprep.subr.mxu0 0.0
    %535 = vmatpush2.msra.mxu0 0.0
    %536 = vmatprep.subr.mxu0 0.0
    %537 = vmatpush2.msra.mxu0 0.0
    %538 = vmatprep.subr.mxu0 0.0
    %539 = vmatpush2.msra.mxu0 0.0
    %540 = vmatprep.subr.mxu0 0.0
    %541 = vmatpush2.msra.mxu0 0.0
    %542 = vmatprep.subr.mxu0 0.0
    %543 = vmatpush2.msra.mxu0 0.0
    %544 = vmatprep.subr.mxu0 0.0
    %545 = vmatpush2.msra.mxu0 0.0
    %546 = vmatprep.subr.mxu0 0.0
    %547 = vmatpush2.msra.mxu0 0.0
    %548 = vmatprep.mubr.f32.mxu0 0.0
    %549 = vmatmul.mubr.f32.gmra.mxu0 %v482
    %v550 = vpop.f32.mrf.mxu0
    %v551 = vadd.f32 0.0, %v550
    %v552 = vpop.f32.mrf.mxu0
    %553 = vdwg.mxu0
    %v555 = vrot.slane %v551, 4
    %v557 = vadd.f32 %v261, %v555
    %v558 = vxor.u32 %v557, 2147483648
    %v559 = vmul.f32 %v558, 1.442695
    %v560 = vpow.pop %v559
    %v561 = vadd.f32 %v560, 1.0
    %v562 = vrcp.pop %v561
    %v563 = vmul.f32 1.0, %v562
    %v564 = vtanh.pop %v557
    %v566 = vrot.slane %v471, 6
    %v568 = vmul.f32 %v563, %v566
    %570 = vrot.lane.b32.xlu0 %v564, 64
    %v571 = vpop.permute.xlu0 %570
    %v573 = vmul.f32 %v563, %v571
    %575 = vrot.lane.b32.xlu0 %v573, 32
    %v576 = vpop.permute.xlu0 %575
    %v578 = vadd.f32 %v568, %v576
    %v579 = vtanh.pop %v578
    %581 = vrot.lane.b32.xlu0 %v579, 64
    %v582 = vpop.permute.xlu0 %581
    %v584 = vmul.f32 %v563, %v582
    %v586 = vrot.slane %v584, 4
    %587 = vrot.lane.b32.xlu0 %v586, 32
    %v588 = vpop.permute.xlu0 %587
    %v589 = vsel %vm273, %v588, 0
    %591 = vmatprep.subr.mxu0 0.0
    %592 = vmatpush1.msra.mxu0 0.0
    %593 = vmatprep.subr.mxu0 0.0
    %594 = vmatpush1.msra.mxu0 0.0
    %595 = vmatprep.subr.mxu0 0.0
    %596 = vmatpush1.msra.mxu0 0.0
    %597 = vmatprep.subr.mxu0 0.0
    %598 = vmatpush1.msra.mxu0 0.0
    %599 = vmatprep.subr.mxu0 0.0
    %600 = vmatpush1.msra.mxu0 0.0
    %601 = vmatprep.subr.mxu0 0.0
    %602 = vmatpush1.msra.mxu0 0.0
    %603 = vmatprep.subr.mxu0 0.0
    %604 = vmatpush1.msra.mxu0 0.0
    %605 = vmatprep.subr.mxu0 0.0
    %606 = vmatpush1.msra.mxu0 0.0
    %607 = vmatprep.subr.mxu0 0.0
    %608 = vmatpush1.msra.mxu0 0.0
    %609 = vmatprep.subr.mxu0 0.0
    %610 = vmatpush1.msra.mxu0 0.0
    %611 = vmatprep.subr.mxu0 0.0
    %612 = vmatpush1.msra.mxu0 0.0
    %613 = vmatprep.subr.mxu0 0.0
    %614 = vmatpush1.msra.mxu0 0.0
    %615 = vmatprep.subr.mxu0 0.0
    %616 = vmatpush1.msra.mxu0 %v272
    %617 = vmatprep.subr.mxu0 0.0
    %618 = vmatpush1.msra.mxu0 %v271
    %619 = vmatprep.subr.mxu0 0.0
    %620 = vmatpush1.msra.mxu0 %v270
    %621 = vmatprep.subr.mxu0 0.0
    %622 = vmatpush1.msra.mxu0 %v269
    %623 = vmatprep.subr.mxu0 0.0
    %624 = vmatpush2.msra.mxu0 0.0
    %625 = vmatprep.subr.mxu0 0.0
    %626 = vmatpush2.msra.mxu0 0.0
    %627 = vmatprep.subr.mxu0 0.0
    %628 = vmatpush2.msra.mxu0 0.0
    %629 = vmatprep.subr.mxu0 0.0
    %630 = vmatpush2.msra.mxu0 0.0
    %631 = vmatprep.subr.mxu0 0.0
    %632 = vmatpush2.msra.mxu0 0.0
    %633 = vmatprep.subr.mxu0 0.0
    %634 = vmatpush2.msra.mxu0 0.0
    %635 = vmatprep.subr.mxu0 0.0
    %636 = vmatpush2.msra.mxu0 0.0
    %637 = vmatprep.subr.mxu0 0.0
    %638 = vmatpush2.msra.mxu0 0.0
    %639 = vmatprep.subr.mxu0 0.0
    %640 = vmatpush2.msra.mxu0 0.0
    %641 = vmatprep.subr.mxu0 0.0
    %642 = vmatpush2.msra.mxu0 0.0
    %643 = vmatprep.subr.mxu0 0.0
    %644 = vmatpush2.msra.mxu0 0.0
    %645 = vmatprep.subr.mxu0 0.0
    %646 = vmatpush2.msra.mxu0 0.0
    %647 = vmatprep.subr.mxu0 0.0
    %648 = vmatpush2.msra.mxu0 0.0
    %649 = vmatprep.subr.mxu0 0.0
    %650 = vmatpush2.msra.mxu0 0.0
    %651 = vmatprep.subr.mxu0 0.0
    %652 = vmatpush2.msra.mxu0 0.0
    %653 = vmatprep.subr.mxu0 0.0
    %654 = vmatpush2.msra.mxu0 0.0
    %655 = vmatprep.mubr.f32.mxu0 0.0
    %656 = vmatmul.mubr.f32.gmra.mxu0 %v589
    %v657 = vpop.f32.mrf.mxu0
    %v658 = vadd.f32 0.0, %v657
    %v659 = vpop.f32.mrf.mxu0
    %660 = vdwg.mxu0
    %v662 = vrot.slane %v658, 2
    %v664 = vadd.f32 %v261, %v662
    %v665 = vxor.u32 %v664, 2147483648
    %v666 = vmul.f32 %v665, 1.442695
    %v667 = vpow.pop %v666
    %v668 = vadd.f32 %v667, 1.0
    %v669 = vrcp.pop %v668
    %v670 = vmul.f32 1.0, %v669
    %v671 = vtanh.pop %v664
    %v673 = vrot.slane %v578, 6
    %v675 = vmul.f32 %v670, %v673
    %677 = vrot.lane.b32.xlu0 %v671, 64
    %v678 = vpop.permute.xlu0 %677
    %v680 = vmul.f32 %v670, %v678
    %682 = vrot.lane.b32.xlu0 %v680, 32
    %v683 = vpop.permute.xlu0 %682
    %v685 = vadd.f32 %v675, %v683
    %v686 = vtanh.pop %v685
    %688 = vrot.lane.b32.xlu0 %v686, 64
    %v689 = vpop.permute.xlu0 %688
    %v691 = vmul.f32 %v670, %v689
    %v693 = vrot.slane %v691, 6
    %694 = vrot.lane.b32.xlu0 %v693, 32
    %v695 = vpop.permute.xlu0 %694
    %v696 = vsel %vm273, %v695, 0
    %698 = vmatprep.subr.mxu0 0.0
    %699 = vmatpush1.msra.mxu0 0.0
    %700 = vmatprep.subr.mxu0 0.0
    %701 = vmatpush1.msra.mxu0 0.0
    %702 = vmatprep.subr.mxu0 0.0
    %703 = vmatpush1.msra.mxu0 0.0
    %704 = vmatprep.subr.mxu0 0.0
    %705 = vmatpush1.msra.mxu0 0.0
    %706 = vmatprep.subr.mxu0 0.0
    %707 = vmatpush1.msra.mxu0 0.0
    %708 = vmatprep.subr.mxu0 0.0
    %709 = vmatpush1.msra.mxu0 0.0
    %710 = vmatprep.subr.mxu0 0.0
    %711 = vmatpush1.msra.mxu0 0.0
    %712 = vmatprep.subr.mxu0 0.0
    %713 = vmatpush1.msra.mxu0 0.0
    %714 = vmatprep.subr.mxu0 0.0
    %715 = vmatpush1.msra.mxu0 0.0
    %716 = vmatprep.subr.mxu0 0.0
    %717 = vmatpush1.msra.mxu0 0.0
    %718 = vmatprep.subr.mxu0 0.0
    %719 = vmatpush1.msra.mxu0 0.0
    %720 = vmatprep.subr.mxu0 0.0
    %721 = vmatpush1.msra.mxu0 0.0
    %722 = vmatprep.subr.mxu0 0.0
    %723 = vmatpush1.msra.mxu0 %v272
    %724 = vmatprep.subr.mxu0 0.0
    %725 = vmatpush1.msra.mxu0 %v271
    %726 = vmatprep.subr.mxu0 0.0
    %727 = vmatpush1.msra.mxu0 %v270
    %728 = vmatprep.subr.mxu0 0.0
    %729 = vmatpush1.msra.mxu0 %v269
    %730 = vmatprep.subr.mxu0 0.0
    %731 = vmatpush2.msra.mxu0 0.0
    %732 = vmatprep.subr.mxu0 0.0
    %733 = vmatpush2.msra.mxu0 0.0
    %734 = vmatprep.subr.mxu0 0.0
    %735 = vmatpush2.msra.mxu0 0.0
    %736 = vmatprep.subr.mxu0 0.0
    %737 = vmatpush2.msra.mxu0 0.0
    %738 = vmatprep.subr.mxu0 0.0
    %739 = vmatpush2.msra.mxu0 0.0
    %740 = vmatprep.subr.mxu0 0.0
    %741 = vmatpush2.msra.mxu0 0.0
    %742 = vmatprep.subr.mxu0 0.0
    %743 = vmatpush2.msra.mxu0 0.0
    %744 = vmatprep.subr.mxu0 0.0
    %745 = vmatpush2.msra.mxu0 0.0
    %746 = vmatprep.subr.mxu0 0.0
    %747 = vmatpush2.msra.mxu0 0.0
    %748 = vmatprep.subr.mxu0 0.0
    %749 = vmatpush2.msra.mxu0 0.0
    %750 = vmatprep.subr.mxu0 0.0
    %751 = vmatpush2.msra.mxu0 0.0
    %752 = vmatprep.subr.mxu0 0.0
    %753 = vmatpush2.msra.mxu0 0.0
    %754 = vmatprep.subr.mxu0 0.0
    %755 = vmatpush2.msra.mxu0 0.0
    %756 = vmatprep.subr.mxu0 0.0
    %757 = vmatpush2.msra.mxu0 0.0
    %758 = vmatprep.subr.mxu0 0.0
    %759 = vmatpush2.msra.mxu0 0.0
    %760 = vmatprep.subr.mxu0 0.0
    %761 = vmatpush2.msra.mxu0 0.0
    %762 = vmatprep.mubr.f32.mxu0 0.0
    %763 = vmatmul.mubr.f32.gmra.mxu0 %v696
    %v764 = vpop.f32.mrf.mxu0
    %v765 = vadd.f32 0.0, %v764
    %v766 = vpop.f32.mrf.mxu0
    %767 = vdwg.mxu0
    %v768 = vadd.f32 %v266, %v765
    %v769 = vxor.u32 %v768, 2147483648
    %v770 = vmul.f32 %v769, 1.442695
    %v771 = vpow.pop %v770
    %v772 = vadd.f32 %v771, 1.0
    %v773 = vrcp.pop %v772
    %v774 = vmul.f32 1.0, %v773
    %v775 = vtanh.pop %v768
    %v777 = vrot.slane %v685, 6
    %v779 = vmul.f32 %v774, %v777
    %781 = vrot.lane.b32.xlu0 %v775, 64
    %v782 = vpop.permute.xlu0 %781
    %v784 = vmul.f32 %v774, %v782
    %786 = vrot.lane.b32.xlu0 %v784, 32
    %v787 = vpop.permute.xlu0 %786
    %v789 = vadd.f32 %v779, %v787
    %v790 = vtanh.pop %v789
    %792 = vrot.lane.b32.xlu0 %v790, 64
    %v793 = vpop.permute.xlu0 %792
    %v795 = vmul.f32 %v774, %v793
    %797 = vrot.lane.b32.xlu0 %v795, 32
    %v798 = vpop.permute.xlu0 %797
    %v799 = vsel %vm273, %v798, 0
    %801 = vmatprep.subr.mxu0 0.0
    %802 = vmatpush1.msra.mxu0 0.0
    %803 = vmatprep.subr.mxu0 0.0
    %804 = vmatpush1.msra.mxu0 0.0
    %805 = vmatprep.subr.mxu0 0.0
    %806 = vmatpush1.msra.mxu0 0.0
    %807 = vmatprep.subr.mxu0 0.0
    %808 = vmatpush1.msra.mxu0 0.0
    %809 = vmatprep.subr.mxu0 0.0
    %810 = vmatpush1.msra.mxu0 0.0
    %811 = vmatprep.subr.mxu0 0.0
    %812 = vmatpush1.msra.mxu0 0.0
    %813 = vmatprep.subr.mxu0 0.0
    %814 = vmatpush1.msra.mxu0 0.0
    %815 = vmatprep.subr.mxu0 0.0
    %816 = vmatpush1.msra.mxu0 0.0
    %817 = vmatprep.subr.mxu0 0.0
    %818 = vmatpush1.msra.mxu0 0.0
    %819 = vmatprep.subr.mxu0 0.0
    %820 = vmatpush1.msra.mxu0 0.0
    %821 = vmatprep.subr.mxu0 0.0
    %822 = vmatpush1.msra.mxu0 0.0
    %823 = vmatprep.subr.mxu0 0.0
    %824 = vmatpush1.msra.mxu0 0.0
    %825 = vmatprep.subr.mxu0 0.0
    %826 = vmatpush1.msra.mxu0 %v272
    %827 = vmatprep.subr.mxu0 0.0
    %828 = vmatpush1.msra.mxu0 %v271
    %829 = vmatprep.subr.mxu0 0.0
    %830 = vmatpush1.msra.mxu0 %v270
    %831 = vmatprep.subr.mxu0 0.0
    %832 = vmatpush1.msra.mxu0 %v269
    %833 = vmatprep.subr.mxu0 0.0
    %834 = vmatpush2.msra.mxu0 0.0
    %835 = vmatprep.subr.mxu0 0.0
    %836 = vmatpush2.msra.mxu0 0.0
    %837 = vmatprep.subr.mxu0 0.0
    %838 = vmatpush2.msra.mxu0 0.0
    %839 = vmatprep.subr.mxu0 0.0
    %840 = vmatpush2.msra.mxu0 0.0
    %841 = vmatprep.subr.mxu0 0.0
    %842 = vmatpush2.msra.mxu0 0.0
    %843 = vmatprep.subr.mxu0 0.0
    %844 = vmatpush2.msra.mxu0 0.0
    %845 = vmatprep.subr.mxu0 0.0
    %846 = vmatpush2.msra.mxu0 0.0
    %847 = vmatprep.subr.mxu0 0.0
    %848 = vmatpush2.msra.mxu0 0.0
    %849 = vmatprep.subr.mxu0 0.0
    %850 = vmatpush2.msra.mxu0 0.0
    %851 = vmatprep.subr.mxu0 0.0
    %852 = vmatpush2.msra.mxu0 0.0
    %853 = vmatprep.subr.mxu0 0.0
    %854 = vmatpush2.msra.mxu0 0.0
    %855 = vmatprep.subr.mxu0 0.0
    %856 = vmatpush2.msra.mxu0 0.0
    %857 = vmatprep.subr.mxu0 0.0
    %858 = vmatpush2.msra.mxu0 0.0
    %859 = vmatprep.subr.mxu0 0.0
    %860 = vmatpush2.msra.mxu0 0.0
    %861 = vmatprep.subr.mxu0 0.0
    %862 = vmatpush2.msra.mxu0 0.0
    %863 = vmatprep.subr.mxu0 0.0
    %864 = vmatpush2.msra.mxu0 0.0
    %865 = vmatprep.mubr.f32.mxu0 0.0
    %866 = vmatmul.mubr.f32.gmra.mxu0 %v799
    %v867 = vpop.f32.mrf.mxu0
    %v868 = vadd.f32 0.0, %v867
    %v869 = vpop.f32.mrf.mxu0
    %870 = vdwg.mxu0
    %v872 = vrot.slane %v868, 6
    %v874 = vadd.f32 %v266, %v872
    %v875 = vxor.u32 %v874, 2147483648
    %v876 = vmul.f32 %v875, 1.442695
    %v877 = vpow.pop %v876
    %v878 = vadd.f32 %v877, 1.0
    %v879 = vrcp.pop %v878
    %v880 = vmul.f32 1.0, %v879
    %v881 = vtanh.pop %v874
    %v883 = vrot.slane %v789, 6
    %v885 = vmul.f32 %v880, %v883
    %887 = vrot.lane.b32.xlu0 %v881, 64
    %v888 = vpop.permute.xlu0 %887
    %v890 = vmul.f32 %v880, %v888
    %892 = vrot.lane.b32.xlu0 %v890, 32
    %v893 = vpop.permute.xlu0 %892
    %v895 = vadd.f32 %v885, %v893
    %v896 = vtanh.pop %v895
    %898 = vrot.lane.b32.xlu0 %v896, 64
    %v899 = vpop.permute.xlu0 %898
    %v901 = vmul.f32 %v880, %v899
    %v903 = vrot.slane %v901, 2
    %904 = vrot.lane.b32.xlu0 %v903, 32
    %v905 = vpop.permute.xlu0 %904
    %v906 = vsel %vm273, %v905, 0
    %908 = vmatprep.subr.mxu0 0.0
    %909 = vmatpush1.msra.mxu0 0.0
    %910 = vmatprep.subr.mxu0 0.0
    %911 = vmatpush1.msra.mxu0 0.0
    %912 = vmatprep.subr.mxu0 0.0
    %913 = vmatpush1.msra.mxu0 0.0
    %914 = vmatprep.subr.mxu0 0.0
    %915 = vmatpush1.msra.mxu0 0.0
    %916 = vmatprep.subr.mxu0 0.0
    %917 = vmatpush1.msra.mxu0 0.0
    %918 = vmatprep.subr.mxu0 0.0
    %919 = vmatpush1.msra.mxu0 0.0
    %920 = vmatprep.subr.mxu0 0.0
    %921 = vmatpush1.msra.mxu0 0.0
    %922 = vmatprep.subr.mxu0 0.0
    %923 = vmatpush1.msra.mxu0 0.0
    %924 = vmatprep.subr.mxu0 0.0
    %925 = vmatpush1.msra.mxu0 0.0
    %926 = vmatprep.subr.mxu0 0.0
    %927 = vmatpush1.msra.mxu0 0.0
    %928 = vmatprep.subr.mxu0 0.0
    %929 = vmatpush1.msra.mxu0 0.0
    %930 = vmatprep.subr.mxu0 0.0
    %931 = vmatpush1.msra.mxu0 0.0
    %932 = vmatprep.subr.mxu0 0.0
    %933 = vmatpush1.msra.mxu0 %v272
    %934 = vmatprep.subr.mxu0 0.0
    %935 = vmatpush1.msra.mxu0 %v271
    %936 = vmatprep.subr.mxu0 0.0
    %937 = vmatpush1.msra.mxu0 %v270
    %938 = vmatprep.subr.mxu0 0.0
    %939 = vmatpush1.msra.mxu0 %v269
    %940 = vmatprep.subr.mxu0 0.0
    %941 = vmatpush2.msra.mxu0 0.0
    %942 = vmatprep.subr.mxu0 0.0
    %943 = vmatpush2.msra.mxu0 0.0
    %944 = vmatprep.subr.mxu0 0.0
    %945 = vmatpush2.msra.mxu0 0.0
    %946 = vmatprep.subr.mxu0 0.0
    %947 = vmatpush2.msra.mxu0 0.0
    %948 = vmatprep.subr.mxu0 0.0
    %949 = vmatpush2.msra.mxu0 0.0
    %950 = vmatprep.subr.mxu0 0.0
    %951 = vmatpush2.msra.mxu0 0.0
    %952 = vmatprep.subr.mxu0 0.0
    %953 = vmatpush2.msra.mxu0 0.0
    %954 = vmatprep.subr.mxu0 0.0
    %955 = vmatpush2.msra.mxu0 0.0
    %956 = vmatprep.subr.mxu0 0.0
    %957 = vmatpush2.msra.mxu0 0.0
    %958 = vmatprep.subr.mxu0 0.0
    %959 = vmatpush2.msra.mxu0 0.0
    %960 = vmatprep.subr.mxu0 0.0
    %961 = vmatpush2.msra.mxu0 0.0
    %962 = vmatprep.subr.mxu0 0.0
    %963 = vmatpush2.msra.mxu0 0.0
    %964 = vmatprep.subr.mxu0 0.0
    %965 = vmatpush2.msra.mxu0 0.0
    %966 = vmatprep.subr.mxu0 0.0
    %967 = vmatpush2.msra.mxu0 0.0
    %968 = vmatprep.subr.mxu0 0.0
    %969 = vmatpush2.msra.mxu0 0.0
    %970 = vmatprep.subr.mxu0 0.0
    %971 = vmatpush2.msra.mxu0 0.0
    %972 = vmatprep.mubr.f32.mxu0 0.0
    %973 = vmatmul.mubr.f32.gmra.mxu0 %v906
    %v974 = vpop.f32.mrf.mxu0
    %v975 = vadd.f32 0.0, %v974
    %v976 = vpop.f32.mrf.mxu0
    %977 = vdwg.mxu0
    %v979 = vrot.slane %v975, 4
    %v981 = vadd.f32 %v266, %v979
    %v982 = vxor.u32 %v981, 2147483648
    %v983 = vmul.f32 %v982, 1.442695
    %v984 = vpow.pop %v983
    %v985 = vadd.f32 %v984, 1.0
    %v986 = vrcp.pop %v985
    %v987 = vmul.f32 1.0, %v986
    %v988 = vtanh.pop %v981
    %v990 = vrot.slane %v895, 6
    %v992 = vmul.f32 %v987, %v990
    %994 = vrot.lane.b32.xlu0 %v988, 64
    %v995 = vpop.permute.xlu0 %994
    %v997 = vmul.f32 %v987, %v995
    %999 = vrot.lane.b32.xlu0 %v997, 32
    %v1000 = vpop.permute.xlu0 %999
    %v1002 = vadd.f32 %v992, %v1000
    %v1003 = vtanh.pop %v1002
    %1005 = vrot.lane.b32.xlu0 %v1003, 64
    %v1006 = vpop.permute.xlu0 %1005
    %v1008 = vmul.f32 %v987, %v1006
    %v1010 = vrot.slane %v1008, 4
    %1011 = vrot.lane.b32.xlu0 %v1010, 32
    %v1012 = vpop.permute.xlu0 %1011
    %v1013 = vsel %vm273, %v1012, 0
    %1015 = vmatprep.subr.mxu0 0.0
    %1016 = vmatpush1.msra.mxu0 0.0
    %1017 = vmatprep.subr.mxu0 0.0
    %1018 = vmatpush1.msra.mxu0 0.0
    %1019 = vmatprep.subr.mxu0 0.0
    %1020 = vmatpush1.msra.mxu0 0.0
    %1021 = vmatprep.subr.mxu0 0.0
    %1022 = vmatpush1.msra.mxu0 0.0
    %1023 = vmatprep.subr.mxu0 0.0
    %1024 = vmatpush1.msra.mxu0 0.0
    %1025 = vmatprep.subr.mxu0 0.0
    %1026 = vmatpush1.msra.mxu0 0.0
    %1027 = vmatprep.subr.mxu0 0.0
    %1028 = vmatpush1.msra.mxu0 0.0
    %1029 = vmatprep.subr.mxu0 0.0
    %1030 = vmatpush1.msra.mxu0 0.0
    %1031 = vmatprep.subr.mxu0 0.0
    %1032 = vmatpush1.msra.mxu0 0.0
    %1033 = vmatprep.subr.mxu0 0.0
    %1034 = vmatpush1.msra.mxu0 0.0
    %1035 = vmatprep.subr.mxu0 0.0
    %1036 = vmatpush1.msra.mxu0 0.0
    %1037 = vmatprep.subr.mxu0 0.0
    %1038 = vmatpush1.msra.mxu0 0.0
    %1039 = vmatprep.subr.mxu0 0.0
    %1040 = vmatpush1.msra.mxu0 %v272
    %1041 = vmatprep.subr.mxu0 0.0
    %1042 = vmatpush1.msra.mxu0 %v271
    %1043 = vmatprep.subr.mxu0 0.0
    %1044 = vmatpush1.msra.mxu0 %v270
    %1045 = vmatprep.subr.mxu0 0.0
    %1046 = vmatpush1.msra.mxu0 %v269
    %1047 = vmatprep.subr.mxu0 0.0
    %1048 = vmatpush2.msra.mxu0 0.0
    %1049 = vmatprep.subr.mxu0 0.0
    %1050 = vmatpush2.msra.mxu0 0.0
    %1051 = vmatprep.subr.mxu0 0.0
    %1052 = vmatpush2.msra.mxu0 0.0
    %1053 = vmatprep.subr.mxu0 0.0
    %1054 = vmatpush2.msra.mxu0 0.0
    %1055 = vmatprep.subr.mxu0 0.0
    %1056 = vmatpush2.msra.mxu0 0.0
    %1057 = vmatprep.subr.mxu0 0.0
    %1058 = vmatpush2.msra.mxu0 0.0
    %1059 = vmatprep.subr.mxu0 0.0
    %1060 = vmatpush2.msra.mxu0 0.0
    %1061 = vmatprep.subr.mxu0 0.0
    %1062 = vmatpush2.msra.mxu0 0.0
    %1063 = vmatprep.subr.mxu0 0.0
    %1064 = vmatpush2.msra.mxu0 0.0
    %1065 = vmatprep.subr.mxu0 0.0
    %1066 = vmatpush2.msra.mxu0 0.0
    %1067 = vmatprep.subr.mxu0 0.0
    %1068 = vmatpush2.msra.mxu0 0.0
    %1069 = vmatprep.subr.mxu0 0.0
    %1070 = vmatpush2.msra.mxu0 0.0
    %1071 = vmatprep.subr.mxu0 0.0
    %1072 = vmatpush2.msra.mxu0 0.0
    %1073 = vmatprep.subr.mxu0 0.0
    %1074 = vmatpush2.msra.mxu0 0.0
    %1075 = vmatprep.subr.mxu0 0.0
    %1076 = vmatpush2.msra.mxu0 0.0
    %1077 = vmatprep.subr.mxu0 0.0
    %1078 = vmatpush2.msra.mxu0 0.0
    %1079 = vmatprep.mubr.f32.mxu0 0.0
    %1080 = vmatmul.mubr.f32.gmra.mxu0 %v1013
    %v1081 = vpop.f32.mrf.mxu0
    %v1082 = vadd.f32 0.0, %v1081
    %v1083 = vpop.f32.mrf.mxu0
    %1084 = vdwg.mxu0
    %v1086 = vrot.slane %v1082, 2
    %v1088 = vadd.f32 %v266, %v1086
    %v1089 = vxor.u32 %v1088, 2147483648
    %v1090 = vmul.f32 %v1089, 1.442695
    %v1091 = vpow.pop %v1090
    %v1092 = vadd.f32 %v1091, 1.0
    %v1093 = vrcp.pop %v1092
    %v1094 = vmul.f32 1.0, %v1093
    %v1095 = vtanh.pop %v1088
    %v1097 = vrot.slane %v1002, 6
    %v1099 = vmul.f32 %v1094, %v1097
    %1101 = vrot.lane.b32.xlu0 %v1095, 64
    %v1102 = vpop.permute.xlu0 %1101
    %v1104 = vmul.f32 %v1094, %v1102
    %1106 = vrot.lane.b32.xlu0 %v1104, 32
    %v1107 = vpop.permute.xlu0 %1106
    %v1109 = vadd.f32 %v1099, %v1107
    %v1110 = vtanh.pop %v1109
    %1112 = vrot.lane.b32.xlu0 %v1110, 64
    %v1113 = vpop.permute.xlu0 %1112
    %v1115 = vmul.f32 %v1094, %v1113
    %1117 = vrot.lane.b32.xlu0 %v1115, 32
    %v1118 = vpop.permute.xlu0 %1117
    %vm1120 = vcmask 261126
    %1121 = vst.msk [vmem:[#allocation4 - $0x6] sm:$0xc0] %vm1120, %v1118
    // Predicated region
    $region18: #{tpu_custom_call.1} parent=1 // pred_check
      _
    $region19: #{tpu_custom_call.1} parent=1 // pred_check_branch
      %1123 = sbr.rel (0) target = $region21
    $region20: #{tpu_custom_call.1} parent=1 // pred_region
      %s1125 = ssub.s32 32, 32
      %1126 = vsyncadd [#allocation5], %s1125
      %s1128 = sshll.u32 [#allocation4], 4
      %s1129 = int_to_ptr.vmem [resolvable:$true] %s1128
      %1131 = dma.vmem_to_hbm [thread:$0]  %s1129, 32, %s5, [#allocation5]
    $region21: #{tpu_custom_call.1} parent=1 // pred_fallthru
      _
    // Predicated region
    $region22: #{tpu_custom_call.1} parent=1 // pred_check
      _
    $region23: #{tpu_custom_call.1} parent=1 // pred_check_branch
      %1133 = sbr.rel (0) target = $region25
    $region24: #{tpu_custom_call.1} parent=1 // pred_region
      %1134 = dma.done [#allocation5], 32
    $region25: #{tpu_custom_call.1} parent=1 // pred_fallthru
      _
    %1135 = vsyncpa [#allocation5], 1

</llo_original>
